<compile_context>
chip_gen: v5e
topology: v5e:2x2
jax: 0.10.0
libtpu: 0.0.40
codegen_flags: <defaults>
</compile_context>

<pallas_src>
import jax
import jax.numpy as jnp
from jax import lax
from jax.experimental import pallas as pl
from jax.experimental.pallas import tpu as pltpu


def linear_hardswish_kernel(x_ref, w_ref, b_ref, o_ref):
    # x tile: (tm, K); w tile: (N, K) in PyTorch [N, K] layout.
    # Contract on K (axis 1 of both) -> (tm, N); accumulate in f32 on the MXU.
    a1 = lax.dot_general(
        x_ref[...],
        w_ref[...],
        dimension_numbers=(((1,), (1,)), ((), ())),
        preferred_element_type=jnp.float32,
    )
    a1 = a1 + b_ref[...]
    # hardswish: a1 * clamp(a1 + 3, 0, 6) / 6
    o_ref[...] = (a1 * jnp.clip(a1 + 3.0, 0.0, 6.0)) * (1.0 / 6.0)


def _round_up(x, m):
    return ((x + m - 1) // m) * m


def linear_hardswish(x, w, b, *, tm=1024):
    """x: [B, K] f32, w: [N, K] f32 (PyTorch Linear layout), b: [N] f32."""
    B, K = x.shape
    N = w.shape[0]
    b2 = b.reshape(1, N)  # (1, N) row for in-kernel broadcast add

    if B <= tm:
        # Fast path (this IS the shipped shape): one block covering the whole
        # problem. Full-array block dims are exempt from the (8,128) rule, so
        # no padding and no output slicing are needed.
        m_block = B
        Bp = B
        x_in = x
        grid = (1,)
    else:
        # Generic large-B path: 1-D grid over M, K and N stay full-dim blocks.
        m_block = tm  # multiple of 8 (sublane-aligned)
        Bp = _round_up(B, m_block)
        x_in = jnp.pad(x, ((0, Bp - B), (0, 0))) if Bp != B else x
        grid = (Bp // m_block,)

    out = pl.pallas_call(
        linear_hardswish_kernel,
        out_shape=jax.ShapeDtypeStruct((Bp, N), jnp.float32),
        grid_spec=pltpu.PrefetchScalarGridSpec(
            num_scalar_prefetch=0,
            grid=grid,
            in_specs=[
                pl.BlockSpec((m_block, K), lambda i: (i, 0)),  # x (tiled on M)
                pl.BlockSpec((N, K), lambda i: (0, 0)),        # w, M-invariant
                pl.BlockSpec((1, N), lambda i: (0, 0)),        # bias, M-invariant
            ],
            out_specs=pl.BlockSpec((m_block, N), lambda i: (i, 0)),
        ),
        compiler_params=pltpu.CompilerParams(
            dimension_semantics=("parallel",),
        ),
        cost_estimate=pl.CostEstimate(
            flops=2 * Bp * K * N,
            transcendentals=0,
            bytes_accessed=4 * (Bp * K + N * K + Bp * N + N),
        ),
    )(x_in, w, b2)

    return out if Bp == B else out[:B]


def _reference(x, w, b):
    a1 = x @ w.T + b
    return a1 * jnp.clip(a1 + 3.0, 0.0, 6.0) / 6.0


if __name__ == "__main__":
    key = jax.random.PRNGKey(0)
    kx, kw, kb, kx2 = jax.random.split(key, 4)

    # Shapes implied by the PyTorch module: x1 = randn(1, 128); Linear(128, 64)
    B, K, N = 1, 128, 64
    x = jax.random.normal(kx, (B, K), dtype=jnp.float32)
    # Deterministic init mimicking nn.Linear's uniform(-1/sqrt(K), 1/sqrt(K))
    bound = 1.0 / jnp.sqrt(jnp.float32(K))
    w = jax.random.uniform(kw, (N, K), minval=-bound, maxval=bound,
                           dtype=jnp.float32)
    b = jax.random.uniform(kb, (N,), minval=-bound, maxval=bound,
                           dtype=jnp.float32)

    # Shipped shape: single-block fast path (no padding, no slice, no scratch).
    out = linear_hardswish(x, w, b)
    out = jax.block_until_ready(out)
    assert out.shape == (B, N)
    assert jnp.allclose(out, _reference(x, w, b), atol=1e-5, rtol=1e-5)

    # Exercise the generic tiled (large-B) path as well, including B padding.
    B2 = 2000
    x2 = jax.random.normal(kx2, (B2, K), dtype=jnp.float32)
    out2 = jax.block_until_ready(linear_hardswish(x2, w, b))
    assert out2.shape == (B2, N)
    assert jnp.allclose(out2, _reference(x2, w, b), atol=1e-4, rtol=1e-4)

    print("KERNEL_OK")
</pallas_src>

<mosaic_0001>
module attributes {stable_mosaic.version = 11 : i64} {
  func.func @linear_hardswish_kernel(%arg0: i32, %arg1: memref<1x128xf32, #tpu.memory_space<vmem>>, %arg2: memref<64x128xf32, #tpu.memory_space<vmem>>, %arg3: memref<1x64xf32, #tpu.memory_space<vmem>>, %arg4: memref<1x64xf32, #tpu.memory_space<vmem>>) attributes {dimension_semantics = [#tpu.dimension_semantics<parallel>], iteration_bounds = array<i64: 1>, scalar_prefetch = 0 : i64, scratch_operands = 0 : i64, tpu.core_type = #tpu.core_type<tc>, window_params = [{transform_indices = @transform_0, window_bounds = array<i64: 1, 128>}, {pipeline_mode = #tpu.pipeline_mode<synchronous>, transform_indices = @transform_1, window_bounds = array<i64: 64, 128>}, {pipeline_mode = #tpu.pipeline_mode<synchronous>, transform_indices = @transform_2, window_bounds = array<i64: 1, 64>}, {transform_indices = @transform_3, window_bounds = array<i64: 1, 64>}]} {
    %c0 = arith.constant 0 : index
    %c0_0 = arith.constant 0 : index
    %0 = vector.load %arg1[%c0, %c0_0] : memref<1x128xf32, #tpu.memory_space<vmem>>, vector<1x128xf32>
    %c0_1 = arith.constant 0 : index
    %c0_2 = arith.constant 0 : index
    %1 = vector.load %arg2[%c0_1, %c0_2] : memref<64x128xf32, #tpu.memory_space<vmem>>, vector<64x128xf32>
    %cst = arith.constant dense<0.000000e+00> : vector<1x64xf32>
    %2 = tpu.matmul %0, %1, %cst {dimension_numbers = #tpu.dot_dimension_numbers<[1], [1], [0], [0], [0, 0, 1, 0], [], []>} : vector<1x128xf32>, vector<64x128xf32>, vector<1x64xf32> -> vector<1x64xf32>
    %c0_3 = arith.constant 0 : index
    %c0_4 = arith.constant 0 : index
    %3 = vector.load %arg3[%c0_3, %c0_4] : memref<1x64xf32, #tpu.memory_space<vmem>>, vector<1x64xf32>
    %4 = arith.addf %2, %3 : vector<1x64xf32>
    %cst_5 = arith.constant 3.000000e+00 : f32
    %5 = vector.broadcast %cst_5 : f32 to vector<1x64xf32>
    %6 = arith.addf %4, %5 : vector<1x64xf32>
    %cst_6 = arith.constant 0.000000e+00 : f32
    %cst_7 = arith.constant 6.000000e+00 : f32
    %7 = vector.broadcast %cst_6 : f32 to vector<1x64xf32>
    %8 = arith.maximumf %7, %6 : vector<1x64xf32>
    %9 = vector.broadcast %cst_7 : f32 to vector<1x64xf32>
    %10 = arith.minimumf %9, %8 : vector<1x64xf32>
    %11 = arith.mulf %4, %10 : vector<1x64xf32>
    %cst_8 = arith.constant 0.166666672 : f32
    %12 = vector.broadcast %cst_8 : f32 to vector<1x64xf32>
    %13 = arith.mulf %11, %12 : vector<1x64xf32>
    %c0_9 = arith.constant 0 : index
    %c0_10 = arith.constant 0 : index
    %14 = vector.load %arg4[%c0_9, %c0_10] : memref<1x64xf32, #tpu.memory_space<vmem>>, vector<1x64xf32>
    tpu.vector_store %arg4[%c0_9, %c0_10], %13 {strides = array<i32>} : memref<1x64xf32, #tpu.memory_space<vmem>>, vector<1x64xf32>,
    return
  }
  func.func @transform_0(%arg0: i32) -> (i32, i32) {
    %c0_i32 = arith.constant 0 : i32
    %c0_i32_0 = arith.constant 0 : i32
    return %arg0, %c0_i32 : i32, i32
  }
  func.func @transform_1(%arg0: i32) -> (i32, i32) {
    %c0_i32 = arith.constant 0 : i32
    %c0_i32_0 = arith.constant 0 : i32
    %c0_i32_1 = arith.constant 0 : i32
    return %c0_i32, %c0_i32_0 : i32, i32
  }
  func.func @transform_2(%arg0: i32) -> (i32, i32) {
    %c0_i32 = arith.constant 0 : i32
    %c0_i32_0 = arith.constant 0 : i32
    %c0_i32_1 = arith.constant 0 : i32
    return %c0_i32, %c0_i32_0 : i32, i32
  }
  func.func @transform_3(%arg0: i32) -> (i32, i32) {
    %c0_i32 = arith.constant 0 : i32
    %c0_i32_0 = arith.constant 0 : i32
    return %arg0, %c0_i32 : i32, i32
  }
}

</mosaic_0001>

<llo_original>
// kernel: tpu_custom_call.1
$region0: #{tpu_custom_call.1}
  #allocation0 [shape = 'u32[]', space=smem, size = 0x4, offset = 0x4, fixed_abs, tag = 'smem constant byte address 0x4 - core index']
  #allocation1 [shape = 'u32[72,128]{1,0:T(1,128)}', space=vmem, size = 0x9000, scoped, tag = 'internal scratch']
  %s0 = inlined_call_operand.hbm [shape: f32[1,128], index: 0, kind: input, shape index: {}]
  %s1 = inlined_call_operand.hbm [shape: f32[64,128], index: 1, kind: input, shape index: {}]
  %s2 = inlined_call_operand.vmem [shape: f32[1,64], index: 2, kind: input, shape index: {}]
  %s3 = inlined_call_operand.hbm [shape: f32[1,64], index: 3, kind: output, shape index: {}]
  %s4 = sld [smem:[#allocation0]]
  $region30: #{tpu_custom_call.1} parent=0
    _
  %s6 = ssub.s32 1, %s4
  %s7 = scalar_select 0, %s6, %s4
  $region1: #{tpu_custom_call.1} parent=0
    #allocation2 [shape = 'u8[512]{0}', space=vmem, size = 0x400, scoped, tag = 'input window, operand 0, single buffered']
    #allocation3 [shape = 's32[1]{0}', space=sflag, size = 0x4, scoped, tag = 'scoped memory for tpu_custom_call.1']
    #allocation4 [shape = 's32[1]{0}', space=sflag, size = 0x4, scoped, tag = 'scoped memory for tpu_custom_call.1']
    #allocation5 [shape = 'u8[32768]{0}', space=vmem, size = 0x8000, scoped, tag = 'input window, operand 1, single buffered']
    #allocation6 [shape = 's32[1]{0}', space=sflag, size = 0x4, scoped, tag = 'scoped memory for tpu_custom_call.1']
    #allocation7 [shape = 'u8[512]{0}', space=vmem, size = 0x400, scoped, tag = 'output window, operand 0, single buffered']
    %8 = vsyncpa [#allocation3], 0
    %9 = vsyncpa [#allocation6], 0
    %10 = vsyncpa [#allocation4], 0
    // Predicated region
    $region2: #{tpu_custom_call.1} parent=1 // pred_check
      _
    $region3: #{tpu_custom_call.1} parent=1 // pred_check_branch
      %12 = sbr.rel (0) target = $region5
    $region4: #{tpu_custom_call.1} parent=1 // pred_region
      %14 = vsyncadd [#allocation3], 0
      %s16 = sshll.u32 %s0, 4
      %s17 = int_to_ptr.hbm [resolvable:$true] %s16
      %s18 = sshll.u32 [#allocation2], 4
      %s19 = int_to_ptr.vmem [resolvable:$true] %s18
      %21 = dma.hbm_to_vmem [thread:$0]  %s17, 16, %s19, [#allocation3]
    $region5: #{tpu_custom_call.1} parent=1 // pred_fallthru
      _
    // Predicated region
    $region6: #{tpu_custom_call.1} parent=1 // pred_check
      _
    $region7: #{tpu_custom_call.1} parent=1 // pred_check_branch
      %23 = sbr.rel (0) target = $region9
    $region8: #{tpu_custom_call.1} parent=1 // pred_region
      %25 = vsyncadd [#allocation6], 0
      %s26 = sshll.u32 %s1, 4
      %s27 = int_to_ptr.hbm [resolvable:$true] %s26
      %s28 = sshll.u32 [#allocation5], 4
      %s29 = int_to_ptr.vmem [resolvable:$true] %s28
      %34 = dma.hbm_to_vmem [thread:$0]  %s27, 1024, %s29, [#allocation6], 128, 128, 8
    $region9: #{tpu_custom_call.1} parent=1 // pred_fallthru
      _
    // Predicated region
    $region10: #{tpu_custom_call.1} parent=1 // pred_check
      _
    $region11: #{tpu_custom_call.1} parent=1 // pred_check_branch
      %36 = sbr.rel (0) target = $region13
    $region12: #{tpu_custom_call.1} parent=1 // pred_region
      _
    $region13: #{tpu_custom_call.1} parent=1 // pred_fallthru
      _
    // Predicated region
    $region14: #{tpu_custom_call.1} parent=1 // pred_check
      _
    $region15: #{tpu_custom_call.1} parent=1 // pred_check_branch
      %38 = sbr.rel (0) target = $region17
    $region16: #{tpu_custom_call.1} parent=1 // pred_region
      %40 = dma.done [#allocation3], 16
    $region17: #{tpu_custom_call.1} parent=1 // pred_fallthru
      _
    // Predicated region
    $region18: #{tpu_custom_call.1} parent=1 // pred_check
      _
    $region19: #{tpu_custom_call.1} parent=1 // pred_check_branch
      %42 = sbr.rel (0) target = $region21
    $region20: #{tpu_custom_call.1} parent=1 // pred_region
      %44 = dma.done [#allocation6], 1024
    $region21: #{tpu_custom_call.1} parent=1 // pred_fallthru
      _
    %v45 = vld [vmem:[#allocation2] sm:$0x1]
    %v46 = vld [vmem:[#allocation5] sm:$0xff]
    %v47 = vld [vmem:[#allocation5 + $0x8] sm:$0xff]
    %v48 = vld [vmem:[#allocation5 + $0x10] sm:$0xff]
    %v49 = vld [vmem:[#allocation5 + $0x18] sm:$0xff]
    %v50 = vld [vmem:[#allocation5 + $0x20] sm:$0xff]
    %v51 = vld [vmem:[#allocation5 + $0x28] sm:$0xff]
    %v52 = vld [vmem:[#allocation5 + $0x30] sm:$0xff]
    %v53 = vld [vmem:[#allocation5 + $0x38] sm:$0xff]
    %v54 = vld [vmem:[%s2] sm:$0x1]
    %55 = vmatpush.xpose.msra.mxu0 0.0
    %56 = vmatpush.xpose.msra.mxu0 0.0
    %57 = vmatpush.xpose.msra.mxu0 0.0
    %58 = vmatpush.xpose.msra.mxu0 0.0
    %59 = vmatpush.xpose.msra.mxu0 0.0
    %60 = vmatpush.xpose.msra.mxu0 0.0
    %61 = vmatpush.xpose.msra.mxu0 0.0
    %62 = vmatpush.xpose.msra.mxu0 0.0
    %63 = vmatpush.xpose.msra.mxu0 %v53
    %64 = vmatpush.xpose.msra.mxu0 %v52
    %65 = vmatpush.xpose.msra.mxu0 %v51
    %66 = vmatpush.xpose.msra.mxu0 %v50
    %67 = vmatpush.xpose.msra.mxu0 %v49
    %68 = vmatpush.xpose.msra.mxu0 %v48
    %69 = vmatpush.xpose.msra.mxu0 %v47
    %70 = vmatpush.xpose.msra.mxu0 %v46
    %71 = vmatmul.f32.gmra.mxu0 %v45
    %v72 = vpop.f32.mrf.mxu0
    %v73 = vadd.f32 %v54, %v72
    %74 = vdwg.mxu0
    %v75 = vadd.f32 %v73, 3.0
    %v76 = vmax.f32 %v75, 0.0
    %v77 = vmin.f32 %v76, 6.0
    %v78 = vmul.f32 %v73, %v77
    %v79 = vmul.f32 %v78, 0.16666667
    %vm80 = vcmask 516096
    %81 = vst.msk [vmem:[#allocation7] sm:$0x1] %vm80, %v79
    // Predicated region
    $region22: #{tpu_custom_call.1} parent=1 // pred_check
      _
    $region23: #{tpu_custom_call.1} parent=1 // pred_check_branch
      %83 = sbr.rel (0) target = $region25
    $region24: #{tpu_custom_call.1} parent=1 // pred_region
      %85 = vsyncadd [#allocation4], 0
      %s87 = sshll.u32 [#allocation7], 4
      %s88 = int_to_ptr.vmem [resolvable:$true] %s87
      %s89 = sshll.u32 %s3, 4
      %s90 = int_to_ptr.hbm [resolvable:$true] %s89
      %92 = dma.vmem_to_hbm [thread:$0]  %s88, 16, %s90, [#allocation4]
    $region25: #{tpu_custom_call.1} parent=1 // pred_fallthru
      _
    // Predicated region
    $region26: #{tpu_custom_call.1} parent=1 // pred_check
      _
    $region27: #{tpu_custom_call.1} parent=1 // pred_check_branch
      %94 = sbr.rel (0) target = $region29
    $region28: #{tpu_custom_call.1} parent=1 // pred_region
      %96 = dma.done [#allocation4], 16
    $region29: #{tpu_custom_call.1} parent=1 // pred_fallthru
      _
    %97 = vsyncpa [#allocation3], 1
    %98 = vsyncpa [#allocation6], 1
    %99 = vsyncpa [#allocation4], 1

</llo_original>
